<compile_context>
chip_gen: v7x
topology: tpu7x:2x2x1
jax: 0.10.0
libtpu: 0.0.40
codegen_flags: <defaults>
</compile_context>

<pallas_src>
import math

import jax
import jax.numpy as jnp
from jax.experimental import pallas as pl
from jax.experimental.pallas import tpu as pltpu


def _round_up(a, b):
    return (a + b - 1) // b * b


def _layernorm_f32(x, gamma, beta, eps=1e-5):
    x = x.astype(jnp.float32)
    mu = jnp.mean(x, axis=-1, keepdims=True)
    xc = x - mu
    var = jnp.mean(xc * xc, axis=-1, keepdims=True)
    return xc * jax.lax.rsqrt(var + eps) * gamma.astype(jnp.float32) + beta.astype(jnp.float32)


def _gelu_erf(h):
    # exact erf form == torch.nn.GELU() default
    return 0.5 * h * (1.0 + jax.lax.erf(h * (1.0 / math.sqrt(2.0))))


# --------------------------------------------------------------------------- #
# Fast path: w1/w2 fully VMEM-resident, grid over row tiles only.
# --------------------------------------------------------------------------- #
def ff_resident_kernel(x_ref, g_ref, b_ref, w1_ref, b1_ref, w2_ref, b2_ref, o_ref):
    xn = _layernorm_f32(x_ref[...], g_ref[...], b_ref[...])
    h = jnp.dot(xn.astype(jnp.bfloat16), w1_ref[...],
                preferred_element_type=jnp.float32)
    h = _gelu_erf(h + b1_ref[...].astype(jnp.float32))
    # Dropout(p=0.0) is the identity.
    y = jnp.dot(h.astype(jnp.bfloat16), w2_ref[...],
                preferred_element_type=jnp.float32)
    o_ref[...] = (y + b2_ref[...].astype(jnp.float32)).astype(o_ref.dtype)


# --------------------------------------------------------------------------- #
# Streamed path: hidden dimension tiled (reduction axis innermost).
# --------------------------------------------------------------------------- #
def ff_streamed_kernel(x_ref, g_ref, b_ref, w1_ref, b1_ref, w2_ref, b2_ref,
                       o_ref, xn_ref, acc_ref):
    k = pl.program_id(1)

    # LayerNorm once per row tile, cached as the bf16 MXU operand.
    @pl.when(k == 0)
    def _():
        xn_ref[...] = _layernorm_f32(
            x_ref[...], g_ref[...], b_ref[...]).astype(xn_ref.dtype)

    h = jnp.dot(xn_ref[...], w1_ref[...], preferred_element_type=jnp.float32)
    h = _gelu_erf(h + b1_ref[...].astype(jnp.float32))
    # Dropout(p=0.0) is the identity.
    # TODO(synk): for dropout > 0 use pltpu.prng_seed / pltpu.prng_random_bits here.
    part = jnp.dot(h.astype(jnp.bfloat16), w2_ref[...],
                   preferred_element_type=jnp.float32)

    @pl.when(k == 0)
    def _():
        acc_ref[...] = part            # first hidden tile: overwrite (no zero-init pass)

    @pl.when(k > 0)
    def _():
        acc_ref[...] += part

    @pl.when(k == pl.num_programs(1) - 1)
    def _():
        o_ref[...] = (acc_ref[...] + b2_ref[...].astype(jnp.float32)).astype(o_ref.dtype)


# --------------------------------------------------------------------------- #
# Wrapper
# --------------------------------------------------------------------------- #
def feedforward_pallas(x, gamma, beta, w1, b1, w2, b2, *,
                       tm=None, th=None, allow_resident=True):
    """x: (B, N, dim). Weights in math convention: w1 (dim, hid), w2 (hid, dim)."""
    B, N, D = x.shape
    H = w1.shape[1]
    assert D % 128 == 0, "feature dim must be lane-aligned (multiple of 128)"
    M = B * N

    # ---- generation-aware VMEM budget (v5e/v6e: ~108 MiB, v7x: ~54 MiB) ----
    try:
        vmem_cap = int(pltpu.get_tpu_info().vmem_capacity_bytes)
    except Exception:
        vmem_cap = 64 * 1024 * 1024
    budget = min(int(0.85 * vmem_cap), vmem_cap - 8 * 1024 * 1024)
    budget = max(budget, 32 * 1024 * 1024)

    # Stream activations as bf16 when VMEM is scarce (v7x-class); LN upcasts to f32.
    stream_bf16 = (x.dtype == jnp.float32) and (vmem_cap <= 80 * 1024 * 1024)
    in_dtype = jnp.bfloat16 if stream_bf16 else x.dtype
    out_dtype = x.dtype
    x_itm = jnp.dtype(in_dtype).itemsize
    o_itm = jnp.dtype(out_dtype).itemsize

    # ---- row tile -----------------------------------------------------------
    tm_pref = tm if tm is not None else 512
    tm = min(_round_up(tm_pref, 8), _round_up(M, 8))
    m_pad = _round_up(M, tm)
    if m_pad // tm < 2 and M > 8:
        # keep >= 2 row tiles so "parallel" can shard across both TensorCores
        tm = _round_up((M + 1) // 2, 8)
        m_pad = _round_up(M, tm)

    # ---- hidden tile ---------------------------------------------------------
    th_pref = th if th is not None else (512 if vmem_cap >= 96 * 1024 * 1024 else 256)
    th = min(_round_up(th_pref, 128), _round_up(H, 128))
    h_pad = _round_up(H, th)

    def resident_bytes(tm_c):
        w = 2 * (D * h_pad + h_pad * D) * 2            # double-buffered bf16 w1 + w2
        io = 2 * tm_c * D * (x_itm + o_itm)            # double-buffered x / out tiles
        hidden = 2 * tm_c * h_pad * 4                  # f32 pre/post-GELU intermediates
        consts = 2 * (3 * D + h_pad) * 4               # gamma / beta / b2 / b1
        return w + io + hidden + consts

    def streamed_bytes(tm_c):
        return (2 * tm_c * D * (x_itm + o_itm)                  # x / out tiles
                + 2 * (D * th + th * D) * 2 + 2 * th * 4        # w1 / w2 / b1 tiles
                + tm_c * D * (2 + 4)                            # xn (bf16) + acc (f32)
                + 2 * tm_c * th * 4                             # f32 hidden intermediates
                + 2 * 3 * D * 4)                                # gamma / beta / b2

    use_resident = allow_resident and resident_bytes(tm) <= budget
    if not use_resident:
        for cand in (tm, 256, 128, 64, 32, 16, 8):
            cand = min(_round_up(cand, 8), tm)
            if streamed_bytes(cand) <= budget:
                tm = cand
                break
        else:
            tm = 8
        m_pad = _round_up(M, tm)

    # ---- inputs (pad rows / hidden units; zero padding is an exact no-op) ---
    x2 = x.reshape(M, D).astype(in_dtype)
    if m_pad != M:
        x2 = jnp.pad(x2, ((0, m_pad - M), (0, 0)))

    w1b = w1.astype(jnp.bfloat16)
    w2b = w2.astype(jnp.bfloat16)
    b1r = b1.reshape(1, H).astype(jnp.float32)
    if h_pad != H:
        # padded hidden units: h = 0, GELU(0) = 0, zero w2 rows -> contribute 0
        w1b = jnp.pad(w1b, ((0, 0), (0, h_pad - H)))
        w2b = jnp.pad(w2b, ((0, h_pad - H), (0, 0)))
        b1r = jnp.pad(b1r, ((0, 0), (0, h_pad - H)))

    g2 = gamma.reshape(1, D).astype(jnp.float32)
    be2 = beta.reshape(1, D).astype(jnp.float32)
    b22 = b2.reshape(1, D).astype(jnp.float32)

    if use_resident:
        grid_spec = pltpu.PrefetchScalarGridSpec(
            num_scalar_prefetch=0,
            grid=(m_pad // tm,),
            in_specs=[
                pl.BlockSpec((tm, D), lambda i: (i, 0)),        # x row tile (streamed)
                pl.BlockSpec((1, D), lambda i: (0, 0)),         # gamma (resident)
                pl.BlockSpec((1, D), lambda i: (0, 0)),         # beta  (resident)
                pl.BlockSpec((D, h_pad), lambda i: (0, 0)),     # w1 fully resident
                pl.BlockSpec((1, h_pad), lambda i: (0, 0)),     # b1 resident
                pl.BlockSpec((h_pad, D), lambda i: (0, 0)),     # w2 fully resident
                pl.BlockSpec((1, D), lambda i: (0, 0)),         # b2 resident
            ],
            out_specs=pl.BlockSpec((tm, D), lambda i: (i, 0)),
        )
        kernel = ff_resident_kernel
        dims = ("parallel",)
    else:
        grid_spec = pltpu.PrefetchScalarGridSpec(
            num_scalar_prefetch=0,
            grid=(m_pad // tm, h_pad // th),
            in_specs=[
                pl.BlockSpec((tm, D), lambda i, k: (i, 0)),     # x row tile
                pl.BlockSpec((1, D), lambda i, k: (0, 0)),      # gamma
                pl.BlockSpec((1, D), lambda i, k: (0, 0)),      # beta
                pl.BlockSpec((D, th), lambda i, k: (0, k)),     # w1 hidden tile
                pl.BlockSpec((1, th), lambda i, k: (0, k)),     # b1 hidden tile
                pl.BlockSpec((th, D), lambda i, k: (k, 0)),     # w2 hidden tile
                pl.BlockSpec((1, D), lambda i, k: (0, 0)),      # b2
            ],
            out_specs=pl.BlockSpec((tm, D), lambda i, k: (i, 0)),
            scratch_shapes=[
                pltpu.VMEM((tm, D), jnp.bfloat16),   # cached LayerNorm output
                pltpu.VMEM((tm, D), jnp.float32),    # f32 output accumulator
            ],
        )
        kernel = ff_streamed_kernel
        dims = ("parallel", "arbitrary")

    out = pl.pallas_call(
        kernel,
        out_shape=jax.ShapeDtypeStruct((m_pad, D), out_dtype),
        grid_spec=grid_spec,
        compiler_params=pltpu.CompilerParams(
            dimension_semantics=dims,
            vmem_limit_bytes=int(budget),
        ),
    )(x2, g2, be2, w1b, b1r, w2b, b22)

    return out[:M].reshape(B, N, D)


# --------------------------------------------------------------------------- #
# Reference, init, test
# --------------------------------------------------------------------------- #
def feedforward_ref(x, gamma, beta, w1, b1, w2, b2):
    xf = x.astype(jnp.float32)
    mu = jnp.mean(xf, axis=-1, keepdims=True)
    var = jnp.mean((xf - mu) ** 2, axis=-1, keepdims=True)
    xn = (xf - mu) / jnp.sqrt(var + 1e-5) * gamma + beta
    h = xn @ w1 + b1
    h = 0.5 * h * (1.0 + jax.lax.erf(h / math.sqrt(2.0)))
    y = h @ w2 + b2
    return y.astype(x.dtype)


def init_params(key, dim, hid_dim):
    """PyTorch-style init: LayerNorm ones/zeros, Linear uniform(+-1/sqrt(fan_in))."""
    k1, k2, k3, k4 = jax.random.split(key, 4)
    gamma = jnp.ones((dim,), jnp.float32)
    beta = jnp.zeros((dim,), jnp.float32)
    bnd1 = 1.0 / math.sqrt(dim)
    w1 = jax.random.uniform(k1, (dim, hid_dim), jnp.float32, -bnd1, bnd1)
    b1 = jax.random.uniform(k2, (hid_dim,), jnp.float32, -bnd1, bnd1)
    bnd2 = 1.0 / math.sqrt(hid_dim)
    w2 = jax.random.uniform(k3, (hid_dim, dim), jnp.float32, -bnd2, bnd2)
    b2 = jax.random.uniform(k4, (dim,), jnp.float32, -bnd2, bnd2)
    return gamma, beta, w1, b1, w2, b2


def _check(y, y_ref, tag):
    err = float(jnp.max(jnp.abs(y.astype(jnp.float32) - y_ref.astype(jnp.float32))))
    # bf16 MXU operands (f32 accumulation) -> looser tolerance than pure-f32 ref.
    assert jnp.allclose(y, y_ref, atol=5e-2, rtol=5e-2), f"{tag}: mismatch, max|err|={err}"


if __name__ == "__main__":
    key = jax.random.PRNGKey(0)

    # 1) small lane-aligned shape -> weight-resident single-pass path
    B, N, DIM, HID = 2, 8, 128, 256
    kx, kp, key = jax.random.split(key, 3)
    x = jax.random.normal(kx, (B, N, DIM), jnp.float32)
    params = init_params(kp, DIM, HID)
    y = feedforward_pallas(x, *params)
    jax.block_until_ready(y)
    assert y.shape == (B, N, DIM)
    _check(y, feedforward_ref(x, *params), "resident")

    # 2) force the streamed path: multi-k accumulation + row and hidden padding
    B2, N2, DIM2, HID2 = 2, 10, 128, 384
    kx2, kp2 = jax.random.split(key)
    xs = jax.random.normal(kx2, (B2, N2, DIM2), jnp.float32)
    params2 = init_params(kp2, DIM2, HID2)
    ys = feedforward_pallas(xs, *params2, th=256, allow_resident=False)
    jax.block_until_ready(ys)
    assert ys.shape == (B2, N2, DIM2)
    _check(ys, feedforward_ref(xs, *params2), "streamed")

    print("KERNEL_OK")
</pallas_src>

<mosaic_0001>
module attributes {stable_mosaic.version = 11 : i64} {
  func.func @ff_resident_kernel(%arg0: i32, %arg1: memref<8x128xbf16, #tpu.memory_space<vmem>>, %arg2: memref<1x128xf32, #tpu.memory_space<vmem>>, %arg3: memref<1x128xf32, #tpu.memory_space<vmem>>, %arg4: memref<128x256xbf16, #tpu.memory_space<vmem>>, %arg5: memref<1x256xf32, #tpu.memory_space<vmem>>, %arg6: memref<256x128xbf16, #tpu.memory_space<vmem>>, %arg7: memref<1x128xf32, #tpu.memory_space<vmem>>, %arg8: memref<8x128xf32, #tpu.memory_space<vmem>>) attributes {dimension_semantics = [#tpu.dimension_semantics<parallel>], iteration_bounds = array<i64: 2>, scalar_prefetch = 0 : i64, scratch_operands = 0 : i64, tpu.core_type = #tpu.core_type<tc>, window_params = [{transform_indices = @transform_0, window_bounds = array<i64: 8, 128>}, {pipeline_mode = #tpu.pipeline_mode<synchronous>, transform_indices = @transform_1, window_bounds = array<i64: 1, 128>}, {pipeline_mode = #tpu.pipeline_mode<synchronous>, transform_indices = @transform_2, window_bounds = array<i64: 1, 128>}, {pipeline_mode = #tpu.pipeline_mode<synchronous>, transform_indices = @transform_3, window_bounds = array<i64: 128, 256>}, {pipeline_mode = #tpu.pipeline_mode<synchronous>, transform_indices = @transform_4, window_bounds = array<i64: 1, 256>}, {pipeline_mode = #tpu.pipeline_mode<synchronous>, transform_indices = @transform_5, window_bounds = array<i64: 256, 128>}, {pipeline_mode = #tpu.pipeline_mode<synchronous>, transform_indices = @transform_6, window_bounds = array<i64: 1, 128>}, {transform_indices = @transform_7, window_bounds = array<i64: 8, 128>}]} {
    %c0 = arith.constant 0 : index
    %c0_0 = arith.constant 0 : index
    %0 = vector.load %arg1[%c0, %c0_0] : memref<8x128xbf16, #tpu.memory_space<vmem>>, vector<8x128xbf16>
    %c0_1 = arith.constant 0 : index
    %c0_2 = arith.constant 0 : index
    %1 = vector.load %arg2[%c0_1, %c0_2] : memref<1x128xf32, #tpu.memory_space<vmem>>, vector<1x128xf32>
    %c0_3 = arith.constant 0 : index
    %c0_4 = arith.constant 0 : index
    %2 = vector.load %arg3[%c0_3, %c0_4] : memref<1x128xf32, #tpu.memory_space<vmem>>, vector<1x128xf32>
    %3 = arith.extf %0 : vector<8x128xbf16> to vector<8x128xf32>
    %cst = arith.constant dense<0.000000e+00> : vector<8xf32>
    %4 = vector.multi_reduction <add>, %3, %cst [1] : vector<8x128xf32> to vector<8xf32>
    %5 = vector.shape_cast %4 : vector<8xf32> to vector<8x1xf32>
    %cst_5 = arith.constant 1.280000e+02 : f32
    %6 = vector.broadcast %cst_5 : f32 to vector<8x1xf32>
    %7 = arith.divf %5, %6 : vector<8x1xf32>
    %8 = vector.broadcast %7 : vector<8x1xf32> to vector<8x128xf32>
    %9 = arith.subf %3, %8 : vector<8x128xf32>
    %10 = arith.mulf %9, %9 : vector<8x128xf32>
    %cst_6 = arith.constant dense<0.000000e+00> : vector<8xf32>
    %11 = vector.multi_reduction <add>, %10, %cst_6 [1] : vector<8x128xf32> to vector<8xf32>
    %12 = vector.shape_cast %11 : vector<8xf32> to vector<8x1xf32>
    %cst_7 = arith.constant 1.280000e+02 : f32
    %13 = vector.broadcast %cst_7 : f32 to vector<8x1xf32>
    %14 = arith.divf %12, %13 : vector<8x1xf32>
    %cst_8 = arith.constant 9.99999974E-6 : f32
    %15 = vector.broadcast %cst_8 : f32 to vector<8x1xf32>
    %16 = arith.addf %14, %15 : vector<8x1xf32>
    %17 = math.rsqrt %16 : vector<8x1xf32>
    %18 = vector.broadcast %17 : vector<8x1xf32> to vector<8x128xf32>
    %19 = arith.mulf %9, %18 : vector<8x128xf32>
    %20 = vector.broadcast %1 : vector<1x128xf32> to vector<8x128xf32>
    %21 = arith.mulf %19, %20 : vector<8x128xf32>
    %22 = vector.broadcast %2 : vector<1x128xf32> to vector<8x128xf32>
    %23 = arith.addf %21, %22 : vector<8x128xf32>
    %24 = arith.truncf %23 : vector<8x128xf32> to vector<8x128xbf16>
    %c0_9 = arith.constant 0 : index
    %c0_10 = arith.constant 0 : index
    %25 = vector.load %arg4[%c0_9, %c0_10] : memref<128x256xbf16, #tpu.memory_space<vmem>>, vector<128x256xbf16>
    %cst_11 = arith.constant dense<0.000000e+00> : vector<8x256xf32>
    %26 = tpu.matmul %24, %25, %cst_11 {dimension_numbers = #tpu.dot_dimension_numbers<[1], [0], [0], [1], [0, 0, 1, 1], [], []>} : vector<8x128xbf16>, vector<128x256xbf16>, vector<8x256xf32> -> vector<8x256xf32>
    %c0_12 = arith.constant 0 : index
    %c0_13 = arith.constant 0 : index
    %27 = vector.load %arg5[%c0_12, %c0_13] : memref<1x256xf32, #tpu.memory_space<vmem>>, vector<1x256xf32>
    %28 = vector.broadcast %27 : vector<1x256xf32> to vector<8x256xf32>
    %29 = arith.addf %26, %28 : vector<8x256xf32>
    %cst_14 = arith.constant 5.000000e-01 : f32
    %30 = vector.broadcast %cst_14 : f32 to vector<8x256xf32>
    %31 = arith.mulf %30, %29 : vector<8x256xf32>
    %cst_15 = arith.constant 0.707106769 : f32
    %32 = vector.broadcast %cst_15 : f32 to vector<8x256xf32>
    %33 = arith.mulf %29, %32 : vector<8x256xf32>
    %34 = math.erf %33 : vector<8x256xf32>
    %cst_16 = arith.constant 1.000000e+00 : f32
    %35 = vector.broadcast %cst_16 : f32 to vector<8x256xf32>
    %36 = arith.addf %35, %34 : vector<8x256xf32>
    %37 = arith.mulf %31, %36 : vector<8x256xf32>
    %38 = arith.truncf %37 : vector<8x256xf32> to vector<8x256xbf16>
    %c0_17 = arith.constant 0 : index
    %c0_18 = arith.constant 0 : index
    %39 = vector.load %arg6[%c0_17, %c0_18] : memref<256x128xbf16, #tpu.memory_space<vmem>>, vector<256x128xbf16>
    %cst_19 = arith.constant dense<0.000000e+00> : vector<8x128xf32>
    %40 = tpu.matmul %38, %39, %cst_19 {dimension_numbers = #tpu.dot_dimension_numbers<[1], [0], [0], [1], [0, 0, 1, 1], [], []>} : vector<8x256xbf16>, vector<256x128xbf16>, vector<8x128xf32> -> vector<8x128xf32>
    %c0_20 = arith.constant 0 : index
    %c0_21 = arith.constant 0 : index
    %41 = vector.load %arg7[%c0_20, %c0_21] : memref<1x128xf32, #tpu.memory_space<vmem>>, vector<1x128xf32>
    %42 = vector.broadcast %41 : vector<1x128xf32> to vector<8x128xf32>
    %43 = arith.addf %40, %42 : vector<8x128xf32>
    %c0_22 = arith.constant 0 : index
    %c0_23 = arith.constant 0 : index
    %44 = vector.load %arg8[%c0_22, %c0_23] : memref<8x128xf32, #tpu.memory_space<vmem>>, vector<8x128xf32>
    tpu.vector_store %arg8[%c0_22, %c0_23], %43 {strides = array<i32>} : memref<8x128xf32, #tpu.memory_space<vmem>>, vector<8x128xf32>,
    return
  }
  func.func @transform_0(%arg0: i32) -> (i32, i32) {
    %c0_i32 = arith.constant 0 : i32
    %c0_i32_0 = arith.constant 0 : i32
    return %arg0, %c0_i32 : i32, i32
  }
  func.func @transform_1(%arg0: i32) -> (i32, i32) {
    %c0_i32 = arith.constant 0 : i32
    %c0_i32_0 = arith.constant 0 : i32
    %c0_i32_1 = arith.constant 0 : i32
    return %c0_i32, %c0_i32_0 : i32, i32
  }
  func.func @transform_2(%arg0: i32) -> (i32, i32) {
    %c0_i32 = arith.constant 0 : i32
    %c0_i32_0 = arith.constant 0 : i32
    %c0_i32_1 = arith.constant 0 : i32
    return %c0_i32, %c0_i32_0 : i32, i32
  }
  func.func @transform_3(%arg0: i32) -> (i32, i32) {
    %c0_i32 = arith.constant 0 : i32
    %c0_i32_0 = arith.constant 0 : i32
    %c0_i32_1 = arith.constant 0 : i32
    return %c0_i32, %c0_i32_0 : i32, i32
  }
  func.func @transform_4(%arg0: i32) -> (i32, i32) {
    %c0_i32 = arith.constant 0 : i32
    %c0_i32_0 = arith.constant 0 : i32
    %c0_i32_1 = arith.constant 0 : i32
    return %c0_i32, %c0_i32_0 : i32, i32
  }
  func.func @transform_5(%arg0: i32) -> (i32, i32) {
    %c0_i32 = arith.constant 0 : i32
    %c0_i32_0 = arith.constant 0 : i32
    %c0_i32_1 = arith.constant 0 : i32
    return %c0_i32, %c0_i32_0 : i32, i32
  }
  func.func @transform_6(%arg0: i32) -> (i32, i32) {
    %c0_i32 = arith.constant 0 : i32
    %c0_i32_0 = arith.constant 0 : i32
    %c0_i32_1 = arith.constant 0 : i32
    return %c0_i32, %c0_i32_0 : i32, i32
  }
  func.func @transform_7(%arg0: i32) -> (i32, i32) {
    %c0_i32 = arith.constant 0 : i32
    %c0_i32_0 = arith.constant 0 : i32
    return %arg0, %c0_i32 : i32, i32
  }
}

</mosaic_0001>

<llo_original>
// kernel: tpu_custom_call.1
$region0: #{tpu_custom_call.1}
  #allocation0 [shape = 'u32[]', space=smem, size = 0x4, offset = 0x4, fixed_abs, tag = 'smem constant byte address 0x4 - core index']
  #allocation1 [shape = 'u32[144,128]{1,0:T(1,128)}', space=vmem, size = 0x12000, scoped, tag = 'internal scratch']
  %s0 = inlined_call_operand.hbm [shape: bf16[16,128], index: 0, kind: input, shape index: {}]
  %s1 = inlined_call_operand.vmem [shape: f32[1,128], index: 1, kind: input, shape index: {}]
  %s2 = inlined_call_operand.vmem [shape: f32[1,128], index: 2, kind: input, shape index: {}]
  %s3 = inlined_call_operand.hbm [shape: bf16[128,256], index: 3, kind: input, shape index: {}]
  %s4 = inlined_call_operand.vmem [shape: f32[1,256], index: 4, kind: input, shape index: {}]
  %s5 = inlined_call_operand.hbm [shape: bf16[256,128], index: 5, kind: input, shape index: {}]
  %s6 = inlined_call_operand.vmem [shape: f32[1,128], index: 6, kind: input, shape index: {}]
  %s7 = inlined_call_operand.hbm [shape: f32[16,128], index: 7, kind: output, shape index: {}]
  %s8 = sld [smem:[#allocation0]]
  $region73: #{tpu_custom_call.1} parent=0
    _
  %s10 = ssub.s32 1, %s8
  %s11 = scalar_select 0, %s10, %s8
  $region1: #{tpu_custom_call.1} parent=0
    #allocation2 [shape = 'u8[4096]{0}', space=vmem, size = 0x1000, scoped, tag = 'input window, operand 0']
    #allocation3 [shape = 's32[2]{0}', space=sflag, size = 0x8, scoped, tag = 'scoped memory for tpu_custom_call.1']
    #allocation4 [shape = 's32[2]{0}', space=sflag, size = 0x8, scoped, tag = 'scoped memory for tpu_custom_call.1']
    #allocation5 [shape = 'u8[65536]{0}', space=vmem, size = 0x10000, scoped, tag = 'input window, operand 3, single buffered']
    #allocation6 [shape = 's32[1]{0}', space=sflag, size = 0x4, scoped, tag = 'scoped memory for tpu_custom_call.1']
    #allocation7 [shape = 'u8[65536]{0}', space=vmem, size = 0x10000, scoped, tag = 'input window, operand 5, single buffered']
    #allocation8 [shape = 'u8[8192]{0}', space=vmem, size = 0x2000, scoped, tag = 'output window, operand 0']
    %12 = vsyncpa [#allocation3], 0
    %s13 = scalar_lea.sflag [#allocation3], 1
    %14 = vsyncpa %s13, 0
    %15 = vsyncpa [#allocation6], 0
    %16 = vsyncpa [#allocation4], 0
    %s17 = scalar_lea.sflag [#allocation4], 1
    %18 = vsyncpa %s17, 0
    loop: start=0, step=1, limit=4
    $region2: #{tpu_custom_call.1} parent=1 // loop_pre_header
      _
    $region3: #{tpu_custom_call.1} parent=1 // loop_header
      %s20 = sphi 0, %s24
      %p21 = scmp.ge.s32.totalorder %s20, 4
      %s30 = sphi 0, %s32
      %s33 = sphi 0, %s30
      %s34 = sphi 0, %s33
      %s50 = sphi 0, %s34
      %s54 = sphi 0, %s54
      %s56 = sphi 0, %s54
      %s57 = sphi 0, %s56
      %s71 = sphi 0, %s57
      %s75 = sphi 0, %s75
      %s77 = sphi 0, %s75
      %s78 = sphi 0, %s77
      %s92 = sphi 0, %s78
      %s96 = sphi 0, %s96
      %s98 = sphi 0, %s96
      %s99 = sphi 0, %s98
      %s113 = sphi 0, %s99
      %s117 = sphi 0, %s117
      %s119 = sphi 0, %s117
      %s120 = sphi 0, %s119
      %s134 = sphi 0, %s120
      %s138 = sphi 0, %s138
      %s140 = sphi 0, %s138
      %s141 = sphi 0, %s140
      %s155 = sphi 0, %s141
      %s159 = sphi 0, %s159
      %s161 = sphi 0, %s159
      %s162 = sphi 0, %s161
      %s176 = sphi 0, %s162
      %s182 = sphi 0, %s184
      %s185 = sphi 0, %s182
      %s186 = sphi 0, %s185
      %s202 = sphi 0, %s186
    $region4: #{tpu_custom_call.1} parent=1 // loop_header_branch
      %23 = sbr.rel (%p21) target = $region8
    $region5: #{tpu_custom_call.1} parent=1 // loop_body
      %s25 = ssub.s32 %s20, 1
      %s26 = ssub.s32 %s20, 2
      %s27 = sadd.s32 %s20, 1
      %s28 = ssub.s32 %s20, %s27
      %p29 = scmp.eq.s32.totalorder %s28, 0
      %s31 = sadd.s32 %s30, 1
      %s32 = scalar_select %p29, %s30, %s31
      %p35 = pneg %p29
      %p36 = scmp.eq.s32.totalorder %s20, 1
      %p37 = por %p35, %p36
      %p38 = scmp.ne.s32.totalorder %s30, %s33
      %p39 = scmp.eq.s32.totalorder %s20, 0
      %p40 = por %p38, %p39
      %p41 = scmp.ne.s32.totalorder %s30, %s33
      %p42 = scmp.eq.s32.totalorder %s25, 1
      %p43 = por %p41, %p42
      %p44 = scmp.ne.s32.totalorder %s33, %s34
      %p45 = scmp.eq.s32.totalorder %s25, 0
      %p46 = por %p44, %p45
      %p47 = scmp.ne.s32.totalorder %s33, %s34
      %p48 = scmp.eq.s32.totalorder %s26, 1
      %p49 = por %p47, %p48
      %p51 = scmp.ne.s32.totalorder %s34, %s50
      %p52 = scmp.eq.s32.totalorder %s26, 0
      %p53 = por %p51, %p52
      %s55 = sadd.s32 %s54, 1
      %p58 = scmp.eq.s32.totalorder %s20, 1
      %p59 = scmp.ne.s32.totalorder %s54, %s56
      %p60 = scmp.eq.s32.totalorder %s20, 0
      %p61 = por %p59, %p60
      %p62 = scmp.ne.s32.totalorder %s54, %s56
      %p63 = scmp.eq.s32.totalorder %s25, 1
      %p64 = por %p62, %p63
      %p65 = scmp.ne.s32.totalorder %s56, %s57
      %p66 = scmp.eq.s32.totalorder %s25, 0
      %p67 = por %p65, %p66
      %p68 = scmp.ne.s32.totalorder %s56, %s57
      %p69 = scmp.eq.s32.totalorder %s26, 1
      %p70 = por %p68, %p69
      %p72 = scmp.ne.s32.totalorder %s57, %s71
      %p73 = scmp.eq.s32.totalorder %s26, 0
      %p74 = por %p72, %p73
      %s76 = sadd.s32 %s75, 1
      %p79 = scmp.eq.s32.totalorder %s20, 1
      %p80 = scmp.ne.s32.totalorder %s75, %s77
      %p81 = scmp.eq.s32.totalorder %s20, 0
      %p82 = por %p80, %p81
      %p83 = scmp.ne.s32.totalorder %s75, %s77
      %p84 = scmp.eq.s32.totalorder %s25, 1
      %p85 = por %p83, %p84
      %p86 = scmp.ne.s32.totalorder %s77, %s78
      %p87 = scmp.eq.s32.totalorder %s25, 0
      %p88 = por %p86, %p87
      %p89 = scmp.ne.s32.totalorder %s77, %s78
      %p90 = scmp.eq.s32.totalorder %s26, 1
      %p91 = por %p89, %p90
      %p93 = scmp.ne.s32.totalorder %s78, %s92
      %p94 = scmp.eq.s32.totalorder %s26, 0
      %p95 = por %p93, %p94
      %s97 = sadd.s32 %s96, 1
      %p100 = scmp.eq.s32.totalorder %s20, 1
      %p101 = scmp.ne.s32.totalorder %s96, %s98
      %p102 = scmp.eq.s32.totalorder %s20, 0
      %p103 = por %p101, %p102
      %p104 = scmp.ne.s32.totalorder %s96, %s98
      %p105 = scmp.eq.s32.totalorder %s25, 1
      %p106 = por %p104, %p105
      %p107 = scmp.ne.s32.totalorder %s98, %s99
      %p108 = scmp.eq.s32.totalorder %s25, 0
      %p109 = por %p107, %p108
      %p110 = scmp.ne.s32.totalorder %s98, %s99
      %p111 = scmp.eq.s32.totalorder %s26, 1
      %p112 = por %p110, %p111
      %p114 = scmp.ne.s32.totalorder %s99, %s113
      %p115 = scmp.eq.s32.totalorder %s26, 0
      %p116 = por %p114, %p115
      %s118 = sadd.s32 %s117, 1
      %p121 = scmp.eq.s32.totalorder %s20, 1
      %p122 = scmp.ne.s32.totalorder %s117, %s119
      %p123 = scmp.eq.s32.totalorder %s20, 0
      %p124 = por %p122, %p123
      %p125 = scmp.ne.s32.totalorder %s117, %s119
      %p126 = scmp.eq.s32.totalorder %s25, 1
      %p127 = por %p125, %p126
      %p128 = scmp.ne.s32.totalorder %s119, %s120
      %p129 = scmp.eq.s32.totalorder %s25, 0
      %p130 = por %p128, %p129
      %p131 = scmp.ne.s32.totalorder %s119, %s120
      %p132 = scmp.eq.s32.totalorder %s26, 1
      %p133 = por %p131, %p132
      %p135 = scmp.ne.s32.totalorder %s120, %s134
      %p136 = scmp.eq.s32.totalorder %s26, 0
      %p137 = por %p135, %p136
      %s139 = sadd.s32 %s138, 1
      %p142 = scmp.eq.s32.totalorder %s20, 1
      %p143 = scmp.ne.s32.totalorder %s138, %s140
      %p144 = scmp.eq.s32.totalorder %s20, 0
      %p145 = por %p143, %p144
      %p146 = scmp.ne.s32.totalorder %s138, %s140
      %p147 = scmp.eq.s32.totalorder %s25, 1
      %p148 = por %p146, %p147
      %p149 = scmp.ne.s32.totalorder %s140, %s141
      %p150 = scmp.eq.s32.totalorder %s25, 0
      %p151 = por %p149, %p150
      %p152 = scmp.ne.s32.totalorder %s140, %s141
      %p153 = scmp.eq.s32.totalorder %s26, 1
      %p154 = por %p152, %p153
      %p156 = scmp.ne.s32.totalorder %s141, %s155
      %p157 = scmp.eq.s32.totalorder %s26, 0
      %p158 = por %p156, %p157
      %s160 = sadd.s32 %s159, 1
      %p163 = scmp.eq.s32.totalorder %s20, 1
      %p164 = scmp.ne.s32.totalorder %s159, %s161
      %p165 = scmp.eq.s32.totalorder %s20, 0
      %p166 = por %p164, %p165
      %p167 = scmp.ne.s32.totalorder %s159, %s161
      %p168 = scmp.eq.s32.totalorder %s25, 1
      %p169 = por %p167, %p168
      %p170 = scmp.ne.s32.totalorder %s161, %s162
      %p171 = scmp.eq.s32.totalorder %s25, 0
      %p172 = por %p170, %p171
      %p173 = scmp.ne.s32.totalorder %s161, %s162
      %p174 = scmp.eq.s32.totalorder %s26, 1
      %p175 = por %p173, %p174
      %p177 = scmp.ne.s32.totalorder %s162, %s176
      %p178 = scmp.eq.s32.totalorder %s26, 0
      %p179 = por %p177, %p178
      %s180 = ssub.s32 %s20, %s27
      %p181 = scmp.eq.s32.totalorder %s180, 0
      %s183 = sadd.s32 %s182, 1
      %s184 = scalar_select %p181, %s182, %s183
      %p187 = pneg %p181
      %p188 = scmp.eq.s32.totalorder %s20, 1
      %p189 = por %p187, %p188
      %p190 = scmp.ne.s32.totalorder %s182, %s185
      %p191 = scmp.eq.s32.totalorder %s20, 0
      %p192 = por %p190, %p191
      %p193 = scmp.ne.s32.totalorder %s182, %s185
      %p194 = scmp.eq.s32.totalorder %s25, 1
      %p195 = por %p193, %p194
      %p196 = scmp.ne.s32.totalorder %s185, %s186
      %p197 = scmp.eq.s32.totalorder %s25, 0
      %p198 = por %p196, %p197
      %p199 = scmp.ne.s32.totalorder %s185, %s186
      %p200 = scmp.eq.s32.totalorder %s26, 1
      %p201 = por %p199, %p200
      %p203 = scmp.ne.s32.totalorder %s186, %s202
      %p204 = scmp.eq.s32.totalorder %s26, 0
      %p205 = por %p203, %p204
      %p206 = scmp.le.s32.totalorder 1, %s20
      %p207 = scmp.lt.s32.totalorder %s20, 3
      %p208 = pnand %p206, %p207
      %p209 = pneg %p208
      // Predicated region
      $region9: #{tpu_custom_call.1} parent=5 // pred_check
        _
      $region10: #{tpu_custom_call.1} parent=5 // pred_check_branch
        %211 = sbr.rel (%p208) target = $region12
      $region11: #{tpu_custom_call.1} parent=5 // pred_region
        %s212 = ssub.s32 %s20, 1
        // Predicated region
        $region13: #{tpu_custom_call.1} parent=11 // pred_check
          %p213 = pneg %p67
        $region14: #{tpu_custom_call.1} parent=11 // pred_check_branch
          %215 = sbr.rel (%p213) target = $region16
        $region15: #{tpu_custom_call.1} parent=11 // pred_region
          _
        $region16: #{tpu_custom_call.1} parent=11 // pred_fallthru
          _
        // Predicated region
        $region17: #{tpu_custom_call.1} parent=11 // pred_check
          %p216 = pneg %p88
        $region18: #{tpu_custom_call.1} parent=11 // pred_check_branch
          %218 = sbr.rel (%p216) target = $region20
        $region19: #{tpu_custom_call.1} parent=11 // pred_region
          _
        $region20: #{tpu_custom_call.1} parent=11 // pred_fallthru
          _
        // Predicated region
        $region21: #{tpu_custom_call.1} parent=11 // pred_check
          %p219 = pneg %p109
        $region22: #{tpu_custom_call.1} parent=11 // pred_check_branch
          %221 = sbr.rel (%p219) target = $region24
        $region23: #{tpu_custom_call.1} parent=11 // pred_region
          %s223 = ssub.s32 2048, 2048
          %224 = vsyncadd [#allocation6], %s223
          %s225 = sshll.u32 [#allocation5], 4
          %s226 = int_to_ptr.vmem [resolvable:$true] %s225
          %231 = dma.hbm_to_vmem [thread:$0]  %s3, 2048, %s226, [#allocation6], 128, 128, 8
        $region24: #{tpu_custom_call.1} parent=11 // pred_fallthru
          _
        // Predicated region
        $region25: #{tpu_custom_call.1} parent=11 // pred_check
          %p232 = pneg %p130
        $region26: #{tpu_custom_call.1} parent=11 // pred_check_branch
          %234 = sbr.rel (%p232) target = $region28
        $region27: #{tpu_custom_call.1} parent=11 // pred_region
          _
        $region28: #{tpu_custom_call.1} parent=11 // pred_fallthru
          _
        // Predicated region
        $region29: #{tpu_custom_call.1} parent=11 // pred_check
          %p235 = pneg %p151
        $region30: #{tpu_custom_call.1} parent=11 // pred_check_branch
          %237 = sbr.rel (%p235) target = $region32
        $region31: #{tpu_custom_call.1} parent=11 // pred_region
          %s239 = ssub.s32 2048, 2048
          %240 = vsyncadd [#allocation6], %s239
          %s241 = sshll.u32 [#allocation7], 4
          %s242 = int_to_ptr.vmem [resolvable:$true] %s241
          %247 = dma.hbm_to_vmem [thread:$0]  %s5, 2048, %s242, [#allocation6], 64, 64, 4
        $region32: #{tpu_custom_call.1} parent=11 // pred_fallthru
          _
        // Predicated region
        $region33: #{tpu_custom_call.1} parent=11 // pred_check
          %p248 = pneg %p172
        $region34: #{tpu_custom_call.1} parent=11 // pred_check_branch
          %250 = sbr.rel (%p248) target = $region36
        $region35: #{tpu_custom_call.1} parent=11 // pred_region
          _
        $region36: #{tpu_custom_call.1} parent=11 // pred_fallthru
          _
      $region12: #{tpu_custom_call.1} parent=5 // pred_fallthru
        _
      %p251 = scmp.lt.s32.totalorder %s20, 2
      // Predicated region
      $region37: #{tpu_custom_call.1} parent=5 // pred_check
        %p252 = pneg %p251
      $region38: #{tpu_custom_call.1} parent=5 // pred_check_branch
        %254 = sbr.rel (%p252) target = $region40
      $region39: #{tpu_custom_call.1} parent=5 // pred_region
        // Predicated region
        $region41: #{tpu_custom_call.1} parent=39 // pred_check
          %p255 = pneg %p40
        $region42: #{tpu_custom_call.1} parent=39 // pred_check_branch
          %257 = sbr.rel (%p255) target = $region44
        $region43: #{tpu_custom_call.1} parent=39 // pred_region
          %s258 = sand.u32 %s30, 1
          %s259 = scalar_lea.sflag [#allocation3], %s258
          %s260 = sand.u32 %s30, 1
          %s261 = smul.addr %s260, 4
          %s262 = scalar_lea.vmem [#allocation2], %s261
          %s264 = ssub.s32 64, 64
          %265 = vsyncadd %s259, %s264
          %s266 = smul.addr %s20, 64
          %s267 = scalar_lea.hbm %s0, %s266
          %s269 = sshll.u32 %s262, 4
          %s270 = int_to_ptr.vmem [resolvable:$true] %s269
          %272 = dma.hbm_to_vmem [thread:$0]  %s267, 64, %s270, %s259
        $region44: #{tpu_custom_call.1} parent=39 // pred_fallthru
          _
      $region40: #{tpu_custom_call.1} parent=5 // pred_fallthru
        _
      %p273 = scmp.le.s32.totalorder 1, %s20
      %p274 = scmp.lt.s32.totalorder %s20, 3
      %p275 = pnand %p273, %p274
      %p276 = pneg %p275
      // Predicated region
      $region45: #{tpu_custom_call.1} parent=5 // pred_check
        _
      $region46: #{tpu_custom_call.1} parent=5 // pred_check_branch
        %278 = sbr.rel (%p275) target = $region48
      $region47: #{tpu_custom_call.1} parent=5 // pred_region
        %s279 = ssub.s32 %s20, 1
        %s280 = sand.u32 %s33, 1
        %s281 = scalar_lea.sflag [#allocation3], %s280
        %s282 = sand.u32 %s33, 1
        %s283 = smul.addr %s282, 4
        %s284 = scalar_lea.vmem [#allocation2], %s283
        // Predicated region
        $region49: #{tpu_custom_call.1} parent=47 // pred_check
          %p285 = pneg %p46
        $region50: #{tpu_custom_call.1} parent=47 // pred_check_branch
          %287 = sbr.rel (%p285) target = $region52
        $region51: #{tpu_custom_call.1} parent=47 // pred_region
          %288 = dma.done %s281, 64
        $region52: #{tpu_custom_call.1} parent=47 // pred_fallthru
          _
        // Predicated region
        $region53: #{tpu_custom_call.1} parent=47 // pred_check
          %p289 = pneg %p109
        $region54: #{tpu_custom_call.1} parent=47 // pred_check_branch
          %291 = sbr.rel (%p289) target = $region56
        $region55: #{tpu_custom_call.1} parent=47 // pred_region
          %292 = dma.done [#allocation6], 2048
        $region56: #{tpu_custom_call.1} parent=47 // pred_fallthru
          _
        // Predicated region
        $region57: #{tpu_custom_call.1} parent=47 // pred_check
          %p293 = pneg %p151
        $region58: #{tpu_custom_call.1} parent=47 // pred_check_branch
          %295 = sbr.rel (%p293) target = $region60
        $region59: #{tpu_custom_call.1} parent=47 // pred_region
          %296 = dma.done [#allocation6], 2048
        $region60: #{tpu_custom_call.1} parent=47 // pred_fallthru
          _
        %s297 = sand.u32 %s33, 1
        %s298 = scalar_lea.sflag [#allocation3], %s297
        %s299 = sand.u32 %s33, 1
        %s300 = smul.addr %s299, 4
        %s301 = scalar_lea.vmem [#allocation2], %s300
        %p302 = pneg %p46
        %p303 = pneg %p43
        %p304 = pneg %p67
        %p305 = pneg %p64
        %p306 = pneg %p88
        %p307 = pneg %p85
        %p308 = pneg %p109
        %p309 = pneg %p106
        %p310 = pneg %p130
        %p311 = pneg %p127
        %p312 = pneg %p151
        %p313 = pneg %p148
        %p314 = pneg %p172
        %p315 = pneg %p169
        %p316 = pneg %p198
        %p317 = pneg %p195
        %s318 = sand.u32 %s185, 1
        %s319 = scalar_lea.sflag [#allocation4], %s318
        %s320 = sand.u32 %s185, 1
        %s321 = smul.addr %s320, 8
        %s322 = scalar_lea.vmem [#allocation8], %s321
        %v324 = vld [vmem:[%s284] sm:$0xf]
        %v325 = vld [vmem:[%s1] sm:$0x1]
        %v326 = vld [vmem:[%s2] sm:$0x1]
        %v327 = vunpack.c.l.bf16 %v324
        %328 = vadd.xlane.f32.xlu0 %v327
        %v329 = vpop.xlane.xlu0 %328
        %v330 = vrcp.pop 128.0
        %v331 = vmul.f32 %v329, %v330
        %v332 = vsub.f32 %v327, %v331
        %v333 = vmul.f32 %v332, %v332
        %334 = vadd.xlane.f32.xlu0 %v333
        %v335 = vpop.xlane.xlu0 %334
        %v336 = vmul.f32 %v335, %v330
        %v337 = vadd.f32 %v336, 1e-05
        %v338 = vrsqrt.pop %v337
        %v339 = vmul.f32 %v332, %v338
        %v341 = vlaneseq
        %v342 = vshrl.u32 %v341, 7
        %v343 = vsub.s32 0, %v342
        %v344 = vrot.slane %v325, %v343
        %v346 = vmul.f32 %v339, %v344
        %v348 = vlaneseq
        %v349 = vshrl.u32 %v348, 7
        %v350 = vsub.s32 0, %v349
        %v351 = vrot.slane %v326, %v350
        %v353 = vadd.f32 %v346, %v351
        %v354 = vpack.c.bf16 %v353, %v353
        %v355 = vld [vmem:[#allocation5] sm:$0xff]
        %v356 = vld [vmem:[#allocation5 + $0x8] sm:$0xff]
        %v357 = vld [vmem:[#allocation5 + $0x10] sm:$0xff]
        %v358 = vld [vmem:[#allocation5 + $0x18] sm:$0xff]
        %v359 = vld [vmem:[#allocation5 + $0x20] sm:$0xff]
        %v360 = vld [vmem:[#allocation5 + $0x28] sm:$0xff]
        %v361 = vld [vmem:[#allocation5 + $0x30] sm:$0xff]
        %v362 = vld [vmem:[#allocation5 + $0x38] sm:$0xff]
        %v363 = vld [vmem:[#allocation5 + $0x40] sm:$0xff]
        %v364 = vld [vmem:[#allocation5 + $0x48] sm:$0xff]
        %v365 = vld [vmem:[#allocation5 + $0x50] sm:$0xff]
        %v366 = vld [vmem:[#allocation5 + $0x58] sm:$0xff]
        %v367 = vld [vmem:[#allocation5 + $0x60] sm:$0xff]
        %v368 = vld [vmem:[#allocation5 + $0x68] sm:$0xff]
        %v369 = vld [vmem:[#allocation5 + $0x70] sm:$0xff]
        %v370 = vld [vmem:[#allocation5 + $0x78] sm:$0xff]
        %v371 = vld [vmem:[%s4] sm:$0x3]
        %v373 = vlaneseq
        %v374 = vshrl.u32 %v373, 7
        %v375 = vsub.s32 0, %v374
        %v376 = vrot.slane %v371, %v375
        %v377 = vlaneseq
        %v378 = vshrl.u32 %v377, 7
        %v379 = vsub.s32 1, %v378
        %v380 = vrot.slane %v371, %v379
        %v399 = vunpack.c.l.b16 %v355
        %v400 = vunpack.c.h.b16 %v355
        %v401 = vunpack.c.l.b16 %v356
        %v402 = vunpack.c.h.b16 %v356
        %v403 = vunpack.c.l.b16 %v357
        %v404 = vunpack.c.h.b16 %v357
        %v405 = vunpack.c.l.b16 %v358
        %v406 = vunpack.c.h.b16 %v358
        %v407 = vunpack.c.l.b16 %v359
        %v408 = vunpack.c.h.b16 %v359
        %v409 = vunpack.c.l.b16 %v360
        %v410 = vunpack.c.h.b16 %v360
        %v411 = vunpack.c.l.b16 %v361
        %v412 = vunpack.c.h.b16 %v361
        %v413 = vunpack.c.l.b16 %v362
        %v414 = vunpack.c.h.b16 %v362
        %v415 = vunpack.c.l.b16 %v363
        %v416 = vunpack.c.h.b16 %v363
        %v417 = vunpack.c.l.b16 %v364
        %v418 = vunpack.c.h.b16 %v364
        %v419 = vunpack.c.l.b16 %v365
        %v420 = vunpack.c.h.b16 %v365
        %v421 = vunpack.c.l.b16 %v366
        %v422 = vunpack.c.h.b16 %v366
        %v423 = vunpack.c.l.b16 %v367
        %v424 = vunpack.c.h.b16 %v367
        %v425 = vunpack.c.l.b16 %v368
        %v426 = vunpack.c.h.b16 %v368
        %v427 = vunpack.c.l.b16 %v369
        %v428 = vunpack.c.h.b16 %v369
        %v429 = vunpack.c.l.b16 %v370
        %v430 = vunpack.c.h.b16 %v370
        %v431 = vpack.c.b16 %v401, %v399
        %v432 = vpack.c.b16 %v402, %v400
        %v433 = vpack.c.b16 %v405, %v403
        %v434 = vpack.c.b16 %v406, %v404
        %v435 = vpack.c.b16 %v409, %v407
        %v436 = vpack.c.b16 %v410, %v408
        %v437 = vpack.c.b16 %v413, %v411
        %v438 = vpack.c.b16 %v414, %v412
        %v439 = vpack.c.b16 %v417, %v415
        %v440 = vpack.c.b16 %v418, %v416
        %v441 = vpack.c.b16 %v421, %v419
        %v442 = vpack.c.b16 %v422, %v420
        %v443 = vpack.c.b16 %v425, %v423
        %v444 = vpack.c.b16 %v426, %v424
        %v445 = vpack.c.b16 %v429, %v427
        %v446 = vpack.c.b16 %v430, %v428
        %463 = vmatprep.subr.bf16.mxu0 %v432
        %464 = vmatpush1.bf16.msra.mxu0 %v431
        %465 = vmatprep.subr.bf16.mxu0 %v434
        %466 = vmatpush1.bf16.msra.mxu0 %v433
        %467 = vmatprep.subr.bf16.mxu0 %v436
        %468 = vmatpush1.bf16.msra.mxu0 %v435
        %469 = vmatprep.subr.bf16.mxu0 %v438
        %470 = vmatpush1.bf16.msra.mxu0 %v437
        %471 = vmatprep.subr.bf16.mxu0 %v440
        %472 = vmatpush1.bf16.msra.mxu0 %v439
        %473 = vmatprep.subr.bf16.mxu0 %v442
        %474 = vmatpush1.bf16.msra.mxu0 %v441
        %475 = vmatprep.subr.bf16.mxu0 %v444
        %476 = vmatpush1.bf16.msra.mxu0 %v443
        %477 = vmatprep.subr.bf16.mxu0 %v446
        %478 = vmatpush1.bf16.msra.mxu0 %v445
        %479 = vmatprep.subr.bf16.mxu0 0
        %480 = vmatpush1.bf16.msra.mxu0 0
        %481 = vmatprep.subr.bf16.mxu0 0
        %482 = vmatpush1.bf16.msra.mxu0 0
        %483 = vmatprep.subr.bf16.mxu0 0
        %484 = vmatpush1.bf16.msra.mxu0 0
        %485 = vmatprep.subr.bf16.mxu0 0
        %486 = vmatpush1.bf16.msra.mxu0 0
        %487 = vmatprep.subr.bf16.mxu0 0
        %488 = vmatpush1.bf16.msra.mxu0 0
        %489 = vmatprep.subr.bf16.mxu0 0
        %490 = vmatpush1.bf16.msra.mxu0 0
        %491 = vmatprep.subr.bf16.mxu0 0
        %492 = vmatpush1.bf16.msra.mxu0 0
        %493 = vmatprep.subr.bf16.mxu0 0
        %494 = vmatpush1.bf16.msra.mxu0 0
        %495 = vmatprep.mubr.bf16.mxu0 0
        %496 = vmatmul.mubr.bf16.gmra.mrb[0].mxu0 %v354
        %v497 = vpop.f32.mrb[0].mxu0
        %v498 = vadd.f32 %v376, %v497
        %v499 = vpop.f32.mrb[0].mxu0
        %v500 = vadd.f32 %v380, %v499
        %v501 = vpop.f32.mrb[0].mxu0
        %v502 = vpop.f32.mrb[0].mxu0
        %503 = vdwg.mxu0
        %v504 = vmul.f32 %v498, 0.5
        %v505 = vmul.f32 %v500, 0.5
        %v506 = vmul.f32 %v498, 0.70710677
        %v507 = vmul.f32 %v500, 0.70710677
        %v508 = verf.f32.pop %v506
        %v509 = verf.f32.pop %v507
        %v510 = vadd.f32 %v508, 1.0
        %v511 = vadd.f32 %v509, 1.0
        %v512 = vmul.f32 %v504, %v510
        %v513 = vmul.f32 %v505, %v511
        %v514 = vpack.c.bf16 %v512, %v512
        %v515 = vpack.c.bf16 %v513, %v513
        %v516 = vld [vmem:[#allocation7] sm:$0xf]
        %v517 = vld [vmem:[#allocation7 + $0x4] sm:$0xf]
        %v518 = vld [vmem:[#allocation7 + $0x8] sm:$0xf]
        %v519 = vld [vmem:[#allocation7 + $0xc] sm:$0xf]
        %v520 = vld [vmem:[#allocation7 + $0x10] sm:$0xf]
        %v521 = vld [vmem:[#allocation7 + $0x14] sm:$0xf]
        %v522 = vld [vmem:[#allocation7 + $0x18] sm:$0xf]
        %v523 = vld [vmem:[#allocation7 + $0x1c] sm:$0xf]
        %v524 = vld [vmem:[#allocation7 + $0x20] sm:$0xf]
        %v525 = vld [vmem:[#allocation7 + $0x24] sm:$0xf]
        %v526 = vld [vmem:[#allocation7 + $0x28] sm:$0xf]
        %v527 = vld [vmem:[#allocation7 + $0x2c] sm:$0xf]
        %v528 = vld [vmem:[#allocation7 + $0x30] sm:$0xf]
        %v529 = vld [vmem:[#allocation7 + $0x34] sm:$0xf]
        %v530 = vld [vmem:[#allocation7 + $0x38] sm:$0xf]
        %v531 = vld [vmem:[#allocation7 + $0x3c] sm:$0xf]
        %v532 = vld [vmem:[#allocation7 + $0x40] sm:$0xf]
        %v533 = vld [vmem:[#allocation7 + $0x44] sm:$0xf]
        %v534 = vld [vmem:[#allocation7 + $0x48] sm:$0xf]
        %v535 = vld [vmem:[#allocation7 + $0x4c] sm:$0xf]
        %v536 = vld [vmem:[#allocation7 + $0x50] sm:$0xf]
        %v537 = vld [vmem:[#allocation7 + $0x54] sm:$0xf]
        %v538 = vld [vmem:[#allocation7 + $0x58] sm:$0xf]
        %v539 = vld [vmem:[#allocation7 + $0x5c] sm:$0xf]
        %v540 = vld [vmem:[#allocation7 + $0x60] sm:$0xf]
        %v541 = vld [vmem:[#allocation7 + $0x64] sm:$0xf]
        %v542 = vld [vmem:[#allocation7 + $0x68] sm:$0xf]
        %v543 = vld [vmem:[#allocation7 + $0x6c] sm:$0xf]
        %v544 = vld [vmem:[#allocation7 + $0x70] sm:$0xf]
        %v545 = vld [vmem:[#allocation7 + $0x74] sm:$0xf]
        %v546 = vld [vmem:[#allocation7 + $0x78] sm:$0xf]
        %v547 = vld [vmem:[#allocation7 + $0x7c] sm:$0xf]
        %v548 = vld [vmem:[%s6] sm:$0x1]
        %v550 = vlaneseq
        %v551 = vshrl.u32 %v550, 7
        %v552 = vsub.s32 0, %v551
        %v553 = vrot.slane %v548, %v552
        %v587 = vunpack.c.l.b16 %v516
        %v588 = vunpack.c.l.b16 %v517
        %v589 = vunpack.c.l.b16 %v518
        %v590 = vunpack.c.l.b16 %v519
        %v591 = vunpack.c.l.b16 %v520
        %v592 = vunpack.c.l.b16 %v521
        %v593 = vunpack.c.l.b16 %v522
        %v594 = vunpack.c.l.b16 %v523
        %v595 = vunpack.c.l.b16 %v524
        %v596 = vunpack.c.l.b16 %v525
        %v597 = vunpack.c.l.b16 %v526
        %v598 = vunpack.c.l.b16 %v527
        %v599 = vunpack.c.l.b16 %v528
        %v600 = vunpack.c.l.b16 %v529
        %v601 = vunpack.c.l.b16 %v530
        %v602 = vunpack.c.l.b16 %v531
        %v603 = vunpack.c.l.b16 %v532
        %v604 = vunpack.c.l.b16 %v533
        %v605 = vunpack.c.l.b16 %v534
        %v606 = vunpack.c.l.b16 %v535
        %v607 = vunpack.c.l.b16 %v536
        %v608 = vunpack.c.l.b16 %v537
        %v609 = vunpack.c.l.b16 %v538
        %v610 = vunpack.c.l.b16 %v539
        %v611 = vunpack.c.l.b16 %v540
        %v612 = vunpack.c.l.b16 %v541
        %v613 = vunpack.c.l.b16 %v542
        %v614 = vunpack.c.l.b16 %v543
        %v615 = vunpack.c.l.b16 %v544
        %v616 = vunpack.c.l.b16 %v545
        %v617 = vunpack.c.l.b16 %v546
        %v618 = vunpack.c.l.b16 %v547
        %v619 = vpack.c.b16 %v588, %v587
        %v620 = vpack.c.b16 %v590, %v589
        %v621 = vpack.c.b16 %v592, %v591
        %v622 = vpack.c.b16 %v594, %v593
        %v623 = vpack.c.b16 %v596, %v595
        %v624 = vpack.c.b16 %v598, %v597
        %v625 = vpack.c.b16 %v600, %v599
        %v626 = vpack.c.b16 %v602, %v601
        %v627 = vpack.c.b16 %v604, %v603
        %v628 = vpack.c.b16 %v606, %v605
        %v629 = vpack.c.b16 %v608, %v607
        %v630 = vpack.c.b16 %v610, %v609
        %v631 = vpack.c.b16 %v612, %v611
        %v632 = vpack.c.b16 %v614, %v613
        %v633 = vpack.c.b16 %v616, %v615
        %v634 = vpack.c.b16 %v618, %v617
        %651 = vmatprep.subr.bf16.mxu0 0
        %652 = vmatpush1.bf16.msra.mxu0 %v619
        %653 = vmatprep.subr.bf16.mxu0 0
        %654 = vmatpush1.bf16.msra.mxu0 %v620
        %655 = vmatprep.subr.bf16.mxu0 0
        %656 = vmatpush1.bf16.msra.mxu0 %v621
        %657 = vmatprep.subr.bf16.mxu0 0
        %658 = vmatpush1.bf16.msra.mxu0 %v622
        %659 = vmatprep.subr.bf16.mxu0 0
        %660 = vmatpush1.bf16.msra.mxu0 %v623
        %661 = vmatprep.subr.bf16.mxu0 0
        %662 = vmatpush1.bf16.msra.mxu0 %v624
        %663 = vmatprep.subr.bf16.mxu0 0
        %664 = vmatpush1.bf16.msra.mxu0 %v625
        %665 = vmatprep.subr.bf16.mxu0 0
        %666 = vmatpush1.bf16.msra.mxu0 %v626
        %667 = vmatprep.subr.bf16.mxu0 0
        %668 = vmatpush1.bf16.msra.mxu0 %v627
        %669 = vmatprep.subr.bf16.mxu0 0
        %670 = vmatpush1.bf16.msra.mxu0 %v628
        %671 = vmatprep.subr.bf16.mxu0 0
        %672 = vmatpush1.bf16.msra.mxu0 %v629
        %673 = vmatprep.subr.bf16.mxu0 0
        %674 = vmatpush1.bf16.msra.mxu0 %v630
        %675 = vmatprep.subr.bf16.mxu0 0
        %676 = vmatpush1.bf16.msra.mxu0 %v631
        %677 = vmatprep.subr.bf16.mxu0 0
        %678 = vmatpush1.bf16.msra.mxu0 %v632
        %679 = vmatprep.subr.bf16.mxu0 0
        %680 = vmatpush1.bf16.msra.mxu0 %v633
        %681 = vmatprep.subr.bf16.mxu0 0
        %682 = vmatpush1.bf16.msra.mxu0 %v634
        %683 = vmatprep.mubr.bf16.mxu0 %v515
        %684 = vmatmul.mubr.bf16.gmra.mrb[0].mxu0 %v514
        %v685 = vpop.f32.mrb[0].mxu0
        %v686 = vadd.f32 %v553, %v685
        %v687 = vpop.f32.mrb[0].mxu0
        %v688 = vpop.f32.mrb[0].mxu0
        %v689 = vpop.f32.mrb[0].mxu0
        %690 = vdwg.mxu0
        %691 = vst [vmem:[%s322] sm:$0xff] %v686
        %s692 = sand.u32 %s185, 1
        %s693 = scalar_lea.sflag [#allocation4], %s692
        %s694 = sand.u32 %s185, 1
        %s695 = smul.addr %s694, 8
        %s696 = scalar_lea.vmem [#allocation8], %s695
        // Predicated region
        $region61: #{tpu_custom_call.1} parent=47 // pred_check
          %p697 = pneg %p195
        $region62: #{tpu_custom_call.1} parent=47 // pred_check_branch
          %699 = sbr.rel (%p697) target = $region64
        $region63: #{tpu_custom_call.1} parent=47 // pred_region
          %s701 = ssub.s32 128, 128
          %702 = vsyncadd %s693, %s701
          %s703 = smul.addr %s25, 128
          %s704 = scalar_lea.hbm %s7, %s703
          %s706 = sshll.u32 %s696, 4
          %s707 = int_to_ptr.vmem [resolvable:$true] %s706
          %709 = dma.vmem_to_hbm [thread:$0]  %s707, 128, %s704, %s693
        $region64: #{tpu_custom_call.1} parent=47 // pred_fallthru
          _
      $region48: #{tpu_custom_call.1} parent=5 // pred_fallthru
        _
      %p710 = scmp.le.s32.totalorder 2, %s20
      // Predicated region
      $region65: #{tpu_custom_call.1} parent=5 // pred_check
        %p711 = pneg %p710
      $region66: #{tpu_custom_call.1} parent=5 // pred_check_branch
        %713 = sbr.rel (%p711) target = $region68
      $region67: #{tpu_custom_call.1} parent=5 // pred_region
        %s714 = ssub.s32 %s20, 2
        // Predicated region
        $region69: #{tpu_custom_call.1} parent=67 // pred_check
          %p715 = pneg %p201
        $region70: #{tpu_custom_call.1} parent=67 // pred_check_branch
          %717 = sbr.rel (%p715) target = $region72
        $region71: #{tpu_custom_call.1} parent=67 // pred_region
          %s718 = sand.u32 %s186, 1
          %s719 = scalar_lea.sflag [#allocation4], %s718
          %s720 = sand.u32 %s186, 1
          %s721 = smul.addr %s720, 8
          %s722 = scalar_lea.vmem [#allocation8], %s721
          %723 = dma.done %s719, 128
        $region72: #{tpu_custom_call.1} parent=67 // pred_fallthru
          _
      $region68: #{tpu_custom_call.1} parent=5 // pred_fallthru
        _
    $region6: #{tpu_custom_call.1} parent=1 // loop_footer
      %s24 = sadd.s32 1, %s20
    $region7: #{tpu_custom_call.1} parent=1 // loop_footer_branch
      %19 = sbr.rel target = $region3
    $region8: #{tpu_custom_call.1} parent=1 // loop_exit
      _
    %724 = vsyncpa [#allocation3], 1
    %s725 = scalar_lea.sflag [#allocation3], 1
    %726 = vsyncpa %s725, 1
    %727 = vsyncpa [#allocation6], 1
    %728 = vsyncpa [#allocation4], 1
    %s729 = scalar_lea.sflag [#allocation4], 1
    %730 = vsyncpa %s729, 1

</llo_original>
